<compile_context>
chip_gen: v7x
topology: tpu7x:2x2x1
jax: 0.10.0
libtpu: 0.0.40
codegen_flags: <defaults>
</compile_context>

<pallas_src>
import jax
import jax.numpy as jnp
from jax import lax
from jax.experimental import pallas as pl
from jax.experimental.pallas import tpu as pltpu


def _round_up(x, m):
    return ((x + m - 1) // m) * m


def _gemm_relu_kernel(a_ref, b_ref, o_ref):
    """Single-block fused GEMM (+bias via folded row) + ReLU on the MXU."""
    acc = jnp.dot(a_ref[...], b_ref[...], preferred_element_type=jnp.float32)
    o_ref[...] = jnp.maximum(acc, 0.0).astype(o_ref.dtype)


class Conv2dReLUPallas:
    """torch.nn.Conv2d (valid padding) + ReLU as im2col + one Pallas GEMM.

    Weights/bias are prepacked once at construction into a lane-dense
    (K_PAD, COUT_PAD) f32 operand with the bias folded in as row K_true.
    """

    def __init__(self, w, b, stride):
        self.cout, self.cin, self.kh, self.kw = w.shape
        self.sh, self.sw = stride
        self.k_true = self.cin * self.kh * self.kw
        # +1 row for the folded bias; pad K to a multiple of 128 so A's lane
        # dim and B's sublane dim are both tile-aligned.
        self.k_pad = _round_up(self.k_true + 1, 128)
        # Lane-dense output block (unmasked stores).
        # TODO(synk): review option B (COUT_PAD=8 + dot_general on transposed
        # RHS) trims the B DMA ~16x; only worth it if profiling shows the
        # B DMA on the critical path of this overhead-bound call.
        self.cout_pad = _round_up(self.cout, 128)

        bmat = jnp.zeros((self.k_pad, self.cout_pad), jnp.float32)
        bmat = bmat.at[: self.k_true, : self.cout].set(
            w.reshape(self.cout, self.k_true).T)
        bmat = bmat.at[self.k_true, : self.cout].set(b)
        self.bmat = bmat                                   # resident constant

    def __call__(self, x):
        n, cin, h, w = x.shape
        assert cin == self.cin
        oh = (h - self.kh) // self.sh + 1
        ow = (w - self.kw) // self.sw + 1
        m = n * oh * ow
        m_pad = _round_up(m, 8)                            # f32 sublane tile

        # im2col (static slices; traced once under jit, fused by XLA).
        # Row order (n, oh, ow); column order (cin, kh, kw) matches the
        # weight packing above.
        # TODO(synk): for larger shapes, move patch extraction in-kernel
        # (x fits trivially in VMEM) and tile M/K with a parallel grid axis.
        rows = []
        for i in range(oh):
            for j in range(ow):
                patch = x[:, :, i * self.sh:i * self.sh + self.kh,
                          j * self.sw:j * self.sw + self.kw]
                rows.append(patch.reshape(n, self.k_true))
        a = jnp.stack(rows, axis=1).reshape(m, self.k_true)
        # Ones column multiplies the folded-bias row of B; padded rows stay
        # zero -> ReLU(0)=0 in the padded region (sliced off below).
        a = jnp.concatenate([a, jnp.ones((m, 1), a.dtype)], axis=1)
        a = jnp.pad(a, ((0, m_pad - m), (0, self.k_pad - (self.k_true + 1))))

        out = pl.pallas_call(
            _gemm_relu_kernel,
            out_shape=jax.ShapeDtypeStruct((m_pad, self.cout_pad), jnp.float32),
            in_specs=[
                pl.BlockSpec(memory_space=pltpu.MemorySpace.VMEM),
                pl.BlockSpec(memory_space=pltpu.MemorySpace.VMEM),
            ],
            out_specs=pl.BlockSpec(memory_space=pltpu.MemorySpace.VMEM),
        )(a, self.bmat)

        out = out[:m, : self.cout]
        return out.reshape(n, oh, ow, self.cout).transpose(0, 3, 1, 2)


class Model:
    """JAX/Pallas port of the reference torch Model (deterministic init)."""

    def __init__(self, key):
        k1, k2 = jax.random.split(key)
        # conv2d_0 (28 -> 4, kernel (6,5), stride (10,11)) is the only layer
        # on the live path; torch.nn.Conv2d-style uniform init.
        bound = 1.0 / float(28 * 6 * 5) ** 0.5
        self.w0 = jax.random.uniform(k1, (4, 28, 6, 5), jnp.float32, -bound, bound)
        self.b0 = jax.random.uniform(k2, (4,), jnp.float32, -bound, bound)
        self.conv0 = Conv2dReLUPallas(self.w0, self.b0, stride=(10, 11))
        # conv2d_2 / conv2d_3 / linear / conv2d_11 only feed dead or
        # ill-formed values (the v5..v11 chain raises in PyTorch because
        # flatten(v1) has 16 features but Linear expects 192), so no Pallas
        # kernels are emitted for them.
        # TODO(synk): no Pallas equivalent for the ill-formed v5..v11 chain.

    def forward(self, x1, x2, x3):
        # v1 = conv2d_0(x1); v2 = relu(v1) -- fused in one Pallas GEMM kernel.
        return self.conv0(x1)


if __name__ == "__main__":
    key = jax.random.PRNGKey(0)
    k_params, k1, k2, k3 = jax.random.split(key, 4)

    # Shapes from the reference module spec.
    x1 = jax.random.normal(k1, (1, 28, 36, 13), jnp.float32)
    x2 = jax.random.normal(k2, (1, 22, 27, 12), jnp.float32)
    x3 = jax.random.normal(k3, (1, 13, 26, 133), jnp.float32)

    model = Model(k_params)
    fwd = jax.jit(model.forward)             # fuses all glue around the kernel
    out = jax.block_until_ready(fwd(x1, x2, x3))

    # Pure-JAX reference (lax conv + bias + ReLU) for correctness.
    ref = lax.conv_general_dilated(
        x1, model.w0, window_strides=(10, 11), padding="VALID",
        dimension_numbers=("NCHW", "OIHW", "NCHW"))
    ref = jnp.maximum(ref + model.b0.reshape(1, -1, 1, 1), 0.0)

    assert out.shape == (1, 4, 4, 1), out.shape
    assert bool(jnp.all(out >= 0.0))          # ReLU output
    max_err = float(jnp.max(jnp.abs(out - ref)))
    assert jnp.allclose(out, ref, atol=5e-2, rtol=5e-2), max_err
    print("KERNEL_OK")
</pallas_src>

<mosaic_0001>
module attributes {stable_mosaic.version = 11 : i64} {
  func.func @_gemm_relu_kernel(%arg0: memref<8x896xf32, #tpu.memory_space<vmem>>, %arg1: memref<896x128xf32, #tpu.memory_space<vmem>>, %arg2: memref<8x128xf32, #tpu.memory_space<vmem>>) attributes {dimension_semantics = [], scalar_prefetch = 0 : i64, scratch_operands = 0 : i64, tpu.core_type = #tpu.core_type<tc>} {
    %c0 = arith.constant 0 : index
    %c0_0 = arith.constant 0 : index
    %0 = vector.load %arg0[%c0, %c0_0] : memref<8x896xf32, #tpu.memory_space<vmem>>, vector<8x896xf32>
    %c0_1 = arith.constant 0 : index
    %c0_2 = arith.constant 0 : index
    %1 = vector.load %arg1[%c0_1, %c0_2] : memref<896x128xf32, #tpu.memory_space<vmem>>, vector<896x128xf32>
    %cst = arith.constant dense<0.000000e+00> : vector<8x128xf32>
    %2 = tpu.matmul %0, %1, %cst {dimension_numbers = #tpu.dot_dimension_numbers<[1], [0], [0], [1], [0, 0, 1, 1], [], []>} : vector<8x896xf32>, vector<896x128xf32>, vector<8x128xf32> -> vector<8x128xf32>
    %cst_3 = arith.constant 0.000000e+00 : f32
    %3 = vector.broadcast %cst_3 : f32 to vector<8x128xf32>
    %4 = arith.maximumf %2, %3 : vector<8x128xf32>
    %c0_4 = arith.constant 0 : index
    %c0_5 = arith.constant 0 : index
    %5 = vector.load %arg2[%c0_4, %c0_5] : memref<8x128xf32, #tpu.memory_space<vmem>>, vector<8x128xf32>
    tpu.vector_store %arg2[%c0_4, %c0_5], %4 {strides = array<i32>} : memref<8x128xf32, #tpu.memory_space<vmem>>, vector<8x128xf32>,
    return
  }
}

</mosaic_0001>

<llo_original>
// kernel: forward.1
$region0: #{forward.1}
  #allocation0 [shape = 'u32[]', space=smem, size = 0x4, offset = 0x4, fixed_abs, tag = 'smem constant byte address 0x4 - core index']
  #allocation1 [shape = 'u32[144,128]{1,0:T(1,128)}', space=vmem, size = 0x12000, scoped, tag = 'internal scratch']
  %s0 = inlined_call_operand.vmem [shape: f32[8,896], index: 0, kind: input, shape index: {}]
  %s1 = inlined_call_operand.vmem [shape: f32[896,128], index: 1, kind: input, shape index: {}]
  %s2 = inlined_call_operand.vmem [shape: f32[8,128], index: 2, kind: output, shape index: {}]
  %s3 = sld [smem:[#allocation0]]
  $region18: #{forward.1} parent=0
    _
  %s5 = ssub.s32 1, %s3
  %s6 = scalar_select 0, %s5, %s3
  // Predicated region
  $region2: #{forward.1} parent=0 // pred_check
    _
  $region3: #{forward.1} parent=0 // pred_check_branch
    %8 = sbr.rel (0) target = $region5
  $region4: #{forward.1} parent=0 // pred_region
    _
  $region5: #{forward.1} parent=0 // pred_fallthru
    _
  // Predicated region
  $region6: #{forward.1} parent=0 // pred_check
    _
  $region7: #{forward.1} parent=0 // pred_check_branch
    %10 = sbr.rel (0) target = $region9
  $region8: #{forward.1} parent=0 // pred_region
    _
  $region9: #{forward.1} parent=0 // pred_fallthru
    _
  %v11 = vld [vmem:[%s0] sm:$0xff]
  %v12 = vld [vmem:[%s0 + $0x8] sm:$0xff]
  %v13 = vld [vmem:[%s0 + $0x10] sm:$0xff]
  %v14 = vld [vmem:[%s0 + $0x18] sm:$0xff]
  %v15 = vld [vmem:[%s0 + $0x20] sm:$0xff]
  %v16 = vld [vmem:[%s0 + $0x28] sm:$0xff]
  %v17 = vld [vmem:[%s0 + $0x30] sm:$0xff]
  %v18 = vld [vmem:[%s1] sm:$0xff]
  %v19 = vld [vmem:[%s1 + $0x8] sm:$0xff]
  %v20 = vld [vmem:[%s1 + $0x10] sm:$0xff]
  %v21 = vld [vmem:[%s1 + $0x18] sm:$0xff]
  %v22 = vld [vmem:[%s1 + $0x20] sm:$0xff]
  %v23 = vld [vmem:[%s1 + $0x28] sm:$0xff]
  %v24 = vld [vmem:[%s1 + $0x30] sm:$0xff]
  %v25 = vld [vmem:[%s1 + $0x38] sm:$0xff]
  %v26 = vld [vmem:[%s1 + $0x40] sm:$0xff]
  %v27 = vld [vmem:[%s1 + $0x48] sm:$0xff]
  %v28 = vld [vmem:[%s1 + $0x50] sm:$0xff]
  %v29 = vld [vmem:[%s1 + $0x58] sm:$0xff]
  %v30 = vld [vmem:[%s1 + $0x60] sm:$0xff]
  %v31 = vld [vmem:[%s1 + $0x68] sm:$0xff]
  %v32 = vld [vmem:[%s1 + $0x70] sm:$0xff]
  %v33 = vld [vmem:[%s1 + $0x78] sm:$0xff]
  %v34 = vld [vmem:[%s1 + $0x80] sm:$0xff]
  %v35 = vld [vmem:[%s1 + $0x88] sm:$0xff]
  %v36 = vld [vmem:[%s1 + $0x90] sm:$0xff]
  %v37 = vld [vmem:[%s1 + $0x98] sm:$0xff]
  %v38 = vld [vmem:[%s1 + $0xa0] sm:$0xff]
  %v39 = vld [vmem:[%s1 + $0xa8] sm:$0xff]
  %v40 = vld [vmem:[%s1 + $0xb0] sm:$0xff]
  %v41 = vld [vmem:[%s1 + $0xb8] sm:$0xff]
  %v42 = vld [vmem:[%s1 + $0xc0] sm:$0xff]
  %v43 = vld [vmem:[%s1 + $0xc8] sm:$0xff]
  %v44 = vld [vmem:[%s1 + $0xd0] sm:$0xff]
  %v45 = vld [vmem:[%s1 + $0xd8] sm:$0xff]
  %v46 = vld [vmem:[%s1 + $0xe0] sm:$0xff]
  %v47 = vld [vmem:[%s1 + $0xe8] sm:$0xff]
  %v48 = vld [vmem:[%s1 + $0xf0] sm:$0xff]
  %v49 = vld [vmem:[%s1 + $0xf8] sm:$0xff]
  %v50 = vld [vmem:[%s1 + $0x100] sm:$0xff]
  %v51 = vld [vmem:[%s1 + $0x108] sm:$0xff]
  %v52 = vld [vmem:[%s1 + $0x110] sm:$0xff]
  %v53 = vld [vmem:[%s1 + $0x118] sm:$0xff]
  %v54 = vld [vmem:[%s1 + $0x120] sm:$0xff]
  %v55 = vld [vmem:[%s1 + $0x128] sm:$0xff]
  %v56 = vld [vmem:[%s1 + $0x130] sm:$0xff]
  %v57 = vld [vmem:[%s1 + $0x138] sm:$0xff]
  %v58 = vld [vmem:[%s1 + $0x140] sm:$0xff]
  %v59 = vld [vmem:[%s1 + $0x148] sm:$0xff]
  %v60 = vld [vmem:[%s1 + $0x150] sm:$0xff]
  %v61 = vld [vmem:[%s1 + $0x158] sm:$0xff]
  %v62 = vld [vmem:[%s1 + $0x160] sm:$0xff]
  %v63 = vld [vmem:[%s1 + $0x168] sm:$0xff]
  %v64 = vld [vmem:[%s1 + $0x170] sm:$0xff]
  %v65 = vld [vmem:[%s1 + $0x178] sm:$0xff]
  %v66 = vld [vmem:[%s1 + $0x180] sm:$0xff]
  %v67 = vld [vmem:[%s1 + $0x188] sm:$0xff]
  %v68 = vld [vmem:[%s1 + $0x190] sm:$0xff]
  %v69 = vld [vmem:[%s1 + $0x198] sm:$0xff]
  %v70 = vld [vmem:[%s1 + $0x1a0] sm:$0xff]
  %v71 = vld [vmem:[%s1 + $0x1a8] sm:$0xff]
  %v72 = vld [vmem:[%s1 + $0x1b0] sm:$0xff]
  %v73 = vld [vmem:[%s1 + $0x1b8] sm:$0xff]
  %v74 = vld [vmem:[%s1 + $0x1c0] sm:$0xff]
  %v75 = vld [vmem:[%s1 + $0x1c8] sm:$0xff]
  %v76 = vld [vmem:[%s1 + $0x1d0] sm:$0xff]
  %v77 = vld [vmem:[%s1 + $0x1d8] sm:$0xff]
  %v78 = vld [vmem:[%s1 + $0x1e0] sm:$0xff]
  %v79 = vld [vmem:[%s1 + $0x1e8] sm:$0xff]
  %v80 = vld [vmem:[%s1 + $0x1f0] sm:$0xff]
  %v81 = vld [vmem:[%s1 + $0x1f8] sm:$0xff]
  %v82 = vld [vmem:[%s1 + $0x200] sm:$0xff]
  %v83 = vld [vmem:[%s1 + $0x208] sm:$0xff]
  %v84 = vld [vmem:[%s1 + $0x210] sm:$0xff]
  %v85 = vld [vmem:[%s1 + $0x218] sm:$0xff]
  %v86 = vld [vmem:[%s1 + $0x220] sm:$0xff]
  %v87 = vld [vmem:[%s1 + $0x228] sm:$0xff]
  %v88 = vld [vmem:[%s1 + $0x230] sm:$0xff]
  %v89 = vld [vmem:[%s1 + $0x238] sm:$0xff]
  %v90 = vld [vmem:[%s1 + $0x240] sm:$0xff]
  %v91 = vld [vmem:[%s1 + $0x248] sm:$0xff]
  %v92 = vld [vmem:[%s1 + $0x250] sm:$0xff]
  %v93 = vld [vmem:[%s1 + $0x258] sm:$0xff]
  %v94 = vld [vmem:[%s1 + $0x260] sm:$0xff]
  %v95 = vld [vmem:[%s1 + $0x268] sm:$0xff]
  %v96 = vld [vmem:[%s1 + $0x270] sm:$0xff]
  %v97 = vld [vmem:[%s1 + $0x278] sm:$0xff]
  %v98 = vld [vmem:[%s1 + $0x280] sm:$0xff]
  %v99 = vld [vmem:[%s1 + $0x288] sm:$0xff]
  %v100 = vld [vmem:[%s1 + $0x290] sm:$0xff]
  %v101 = vld [vmem:[%s1 + $0x298] sm:$0xff]
  %v102 = vld [vmem:[%s1 + $0x2a0] sm:$0xff]
  %v103 = vld [vmem:[%s1 + $0x2a8] sm:$0xff]
  %v104 = vld [vmem:[%s1 + $0x2b0] sm:$0xff]
  %v105 = vld [vmem:[%s1 + $0x2b8] sm:$0xff]
  %v106 = vld [vmem:[%s1 + $0x2c0] sm:$0xff]
  %v107 = vld [vmem:[%s1 + $0x2c8] sm:$0xff]
  %v108 = vld [vmem:[%s1 + $0x2d0] sm:$0xff]
  %v109 = vld [vmem:[%s1 + $0x2d8] sm:$0xff]
  %v110 = vld [vmem:[%s1 + $0x2e0] sm:$0xff]
  %v111 = vld [vmem:[%s1 + $0x2e8] sm:$0xff]
  %v112 = vld [vmem:[%s1 + $0x2f0] sm:$0xff]
  %v113 = vld [vmem:[%s1 + $0x2f8] sm:$0xff]
  %v114 = vld [vmem:[%s1 + $0x300] sm:$0xff]
  %v115 = vld [vmem:[%s1 + $0x308] sm:$0xff]
  %v116 = vld [vmem:[%s1 + $0x310] sm:$0xff]
  %v117 = vld [vmem:[%s1 + $0x318] sm:$0xff]
  %v118 = vld [vmem:[%s1 + $0x320] sm:$0xff]
  %v119 = vld [vmem:[%s1 + $0x328] sm:$0xff]
  %v120 = vld [vmem:[%s1 + $0x330] sm:$0xff]
  %v121 = vld [vmem:[%s1 + $0x338] sm:$0xff]
  %v122 = vld [vmem:[%s1 + $0x340] sm:$0xff]
  %v123 = vld [vmem:[%s1 + $0x348] sm:$0xff]
  %v124 = vld [vmem:[%s1 + $0x350] sm:$0xff]
  %v125 = vld [vmem:[%s1 + $0x358] sm:$0xff]
  %v126 = vld [vmem:[%s1 + $0x360] sm:$0xff]
  %v127 = vld [vmem:[%s1 + $0x368] sm:$0xff]
  %v128 = vld [vmem:[%s1 + $0x370] sm:$0xff]
  %v129 = vld [vmem:[%s1 + $0x378] sm:$0xff]
  %130 = vmatprep.subr.mxu0 0.0
  %131 = vmatpush1.msra.mxu0 %v18
  %132 = vmatprep.subr.mxu0 0.0
  %133 = vmatpush1.msra.mxu0 %v19
  %134 = vmatprep.subr.mxu0 0.0
  %135 = vmatpush1.msra.mxu0 %v20
  %136 = vmatprep.subr.mxu0 0.0
  %137 = vmatpush1.msra.mxu0 %v21
  %138 = vmatprep.subr.mxu0 0.0
  %139 = vmatpush1.msra.mxu0 %v22
  %140 = vmatprep.subr.mxu0 0.0
  %141 = vmatpush1.msra.mxu0 %v23
  %142 = vmatprep.subr.mxu0 0.0
  %143 = vmatpush1.msra.mxu0 %v24
  %144 = vmatprep.subr.mxu0 0.0
  %145 = vmatpush1.msra.mxu0 %v25
  %146 = vmatprep.subr.mxu0 0.0
  %147 = vmatpush1.msra.mxu0 %v26
  %148 = vmatprep.subr.mxu0 0.0
  %149 = vmatpush1.msra.mxu0 %v27
  %150 = vmatprep.subr.mxu0 0.0
  %151 = vmatpush1.msra.mxu0 %v28
  %152 = vmatprep.subr.mxu0 0.0
  %153 = vmatpush1.msra.mxu0 %v29
  %154 = vmatprep.subr.mxu0 0.0
  %155 = vmatpush1.msra.mxu0 %v30
  %156 = vmatprep.subr.mxu0 0.0
  %157 = vmatpush1.msra.mxu0 %v31
  %158 = vmatprep.subr.mxu0 0.0
  %159 = vmatpush1.msra.mxu0 %v32
  %160 = vmatprep.subr.mxu0 0.0
  %161 = vmatpush1.msra.mxu0 %v33
  %162 = vmatprep.subr.mxu0 0.0
  %163 = vmatpush1.msra.mxu0 %v34
  %164 = vmatprep.subr.mxu0 0.0
  %165 = vmatpush1.msra.mxu0 %v35
  %166 = vmatprep.subr.mxu0 0.0
  %167 = vmatpush1.msra.mxu0 %v36
  %168 = vmatprep.subr.mxu0 0.0
  %169 = vmatpush1.msra.mxu0 %v37
  %170 = vmatprep.subr.mxu0 0.0
  %171 = vmatpush1.msra.mxu0 %v38
  %172 = vmatprep.subr.mxu0 0.0
  %173 = vmatpush1.msra.mxu0 %v39
  %174 = vmatprep.subr.mxu0 0.0
  %175 = vmatpush1.msra.mxu0 %v40
  %176 = vmatprep.subr.mxu0 0.0
  %177 = vmatpush1.msra.mxu0 %v41
  %178 = vmatprep.subr.mxu0 0.0
  %179 = vmatpush1.msra.mxu0 %v42
  %180 = vmatprep.subr.mxu0 0.0
  %181 = vmatpush1.msra.mxu0 %v43
  %182 = vmatprep.subr.mxu0 0.0
  %183 = vmatpush1.msra.mxu0 %v44
  %184 = vmatprep.subr.mxu0 0.0
  %185 = vmatpush1.msra.mxu0 %v45
  %186 = vmatprep.subr.mxu0 0.0
  %187 = vmatpush1.msra.mxu0 %v46
  %188 = vmatprep.subr.mxu0 0.0
  %189 = vmatpush1.msra.mxu0 %v47
  %190 = vmatprep.subr.mxu0 0.0
  %191 = vmatpush1.msra.mxu0 %v48
  %192 = vmatprep.subr.mxu0 0.0
  %193 = vmatpush1.msra.mxu0 %v49
  %194 = vmatprep.mubr.f32.mxu0 %v12
  %195 = vmatmul.mubr.f32.gmra.mrb[0].mxu0 %v11
  %v196 = vpop.f32.mrb[0].mxu0
  %v197 = vadd.f32 0.0, %v196
  %v198 = vpop.f32.mrb[0].mxu0
  %199 = vdwg.mxu0
  %200 = vmatprep.subr.mxu0 0.0
  %201 = vmatpush1.msra.mxu0 %v50
  %202 = vmatprep.subr.mxu0 0.0
  %203 = vmatpush1.msra.mxu0 %v51
  %204 = vmatprep.subr.mxu0 0.0
  %205 = vmatpush1.msra.mxu0 %v52
  %206 = vmatprep.subr.mxu0 0.0
  %207 = vmatpush1.msra.mxu0 %v53
  %208 = vmatprep.subr.mxu0 0.0
  %209 = vmatpush1.msra.mxu0 %v54
  %210 = vmatprep.subr.mxu0 0.0
  %211 = vmatpush1.msra.mxu0 %v55
  %212 = vmatprep.subr.mxu0 0.0
  %213 = vmatpush1.msra.mxu0 %v56
  %214 = vmatprep.subr.mxu0 0.0
  %215 = vmatpush1.msra.mxu0 %v57
  %216 = vmatprep.subr.mxu0 0.0
  %217 = vmatpush1.msra.mxu0 %v58
  %218 = vmatprep.subr.mxu0 0.0
  %219 = vmatpush1.msra.mxu0 %v59
  %220 = vmatprep.subr.mxu0 0.0
  %221 = vmatpush1.msra.mxu0 %v60
  %222 = vmatprep.subr.mxu0 0.0
  %223 = vmatpush1.msra.mxu0 %v61
  %224 = vmatprep.subr.mxu0 0.0
  %225 = vmatpush1.msra.mxu0 %v62
  %226 = vmatprep.subr.mxu0 0.0
  %227 = vmatpush1.msra.mxu0 %v63
  %228 = vmatprep.subr.mxu0 0.0
  %229 = vmatpush1.msra.mxu0 %v64
  %230 = vmatprep.subr.mxu0 0.0
  %231 = vmatpush1.msra.mxu0 %v65
  %232 = vmatprep.subr.mxu0 0.0
  %233 = vmatpush1.msra.mxu0 %v66
  %234 = vmatprep.subr.mxu0 0.0
  %235 = vmatpush1.msra.mxu0 %v67
  %236 = vmatprep.subr.mxu0 0.0
  %237 = vmatpush1.msra.mxu0 %v68
  %238 = vmatprep.subr.mxu0 0.0
  %239 = vmatpush1.msra.mxu0 %v69
  %240 = vmatprep.subr.mxu0 0.0
  %241 = vmatpush1.msra.mxu0 %v70
  %242 = vmatprep.subr.mxu0 0.0
  %243 = vmatpush1.msra.mxu0 %v71
  %244 = vmatprep.subr.mxu0 0.0
  %245 = vmatpush1.msra.mxu0 %v72
  %246 = vmatprep.subr.mxu0 0.0
  %247 = vmatpush1.msra.mxu0 %v73
  %248 = vmatprep.subr.mxu0 0.0
  %249 = vmatpush1.msra.mxu0 %v74
  %250 = vmatprep.subr.mxu0 0.0
  %251 = vmatpush1.msra.mxu0 %v75
  %252 = vmatprep.subr.mxu0 0.0
  %253 = vmatpush1.msra.mxu0 %v76
  %254 = vmatprep.subr.mxu0 0.0
  %255 = vmatpush1.msra.mxu0 %v77
  %256 = vmatprep.subr.mxu0 0.0
  %257 = vmatpush1.msra.mxu0 %v78
  %258 = vmatprep.subr.mxu0 0.0
  %259 = vmatpush1.msra.mxu0 %v79
  %260 = vmatprep.subr.mxu0 0.0
  %261 = vmatpush1.msra.mxu0 %v80
  %262 = vmatprep.subr.mxu0 0.0
  %263 = vmatpush1.msra.mxu0 %v81
  %264 = vmatprep.mubr.f32.mxu0 %v14
  %265 = vmatmul.mubr.f32.gmra.mrb[0].mxu0 %v13
  %v266 = vpop.f32.mrb[0].mxu0
  %v267 = vadd.f32 %v197, %v266
  %v268 = vpop.f32.mrb[0].mxu0
  %269 = vdwg.mxu0
  %270 = vmatprep.subr.mxu0 0.0
  %271 = vmatpush1.msra.mxu0 %v82
  %272 = vmatprep.subr.mxu0 0.0
  %273 = vmatpush1.msra.mxu0 %v83
  %274 = vmatprep.subr.mxu0 0.0
  %275 = vmatpush1.msra.mxu0 %v84
  %276 = vmatprep.subr.mxu0 0.0
  %277 = vmatpush1.msra.mxu0 %v85
  %278 = vmatprep.subr.mxu0 0.0
  %279 = vmatpush1.msra.mxu0 %v86
  %280 = vmatprep.subr.mxu0 0.0
  %281 = vmatpush1.msra.mxu0 %v87
  %282 = vmatprep.subr.mxu0 0.0
  %283 = vmatpush1.msra.mxu0 %v88
  %284 = vmatprep.subr.mxu0 0.0
  %285 = vmatpush1.msra.mxu0 %v89
  %286 = vmatprep.subr.mxu0 0.0
  %287 = vmatpush1.msra.mxu0 %v90
  %288 = vmatprep.subr.mxu0 0.0
  %289 = vmatpush1.msra.mxu0 %v91
  %290 = vmatprep.subr.mxu0 0.0
  %291 = vmatpush1.msra.mxu0 %v92
  %292 = vmatprep.subr.mxu0 0.0
  %293 = vmatpush1.msra.mxu0 %v93
  %294 = vmatprep.subr.mxu0 0.0
  %295 = vmatpush1.msra.mxu0 %v94
  %296 = vmatprep.subr.mxu0 0.0
  %297 = vmatpush1.msra.mxu0 %v95
  %298 = vmatprep.subr.mxu0 0.0
  %299 = vmatpush1.msra.mxu0 %v96
  %300 = vmatprep.subr.mxu0 0.0
  %301 = vmatpush1.msra.mxu0 %v97
  %302 = vmatprep.subr.mxu0 0.0
  %303 = vmatpush1.msra.mxu0 %v98
  %304 = vmatprep.subr.mxu0 0.0
  %305 = vmatpush1.msra.mxu0 %v99
  %306 = vmatprep.subr.mxu0 0.0
  %307 = vmatpush1.msra.mxu0 %v100
  %308 = vmatprep.subr.mxu0 0.0
  %309 = vmatpush1.msra.mxu0 %v101
  %310 = vmatprep.subr.mxu0 0.0
  %311 = vmatpush1.msra.mxu0 %v102
  %312 = vmatprep.subr.mxu0 0.0
  %313 = vmatpush1.msra.mxu0 %v103
  %314 = vmatprep.subr.mxu0 0.0
  %315 = vmatpush1.msra.mxu0 %v104
  %316 = vmatprep.subr.mxu0 0.0
  %317 = vmatpush1.msra.mxu0 %v105
  %318 = vmatprep.subr.mxu0 0.0
  %319 = vmatpush1.msra.mxu0 %v106
  %320 = vmatprep.subr.mxu0 0.0
  %321 = vmatpush1.msra.mxu0 %v107
  %322 = vmatprep.subr.mxu0 0.0
  %323 = vmatpush1.msra.mxu0 %v108
  %324 = vmatprep.subr.mxu0 0.0
  %325 = vmatpush1.msra.mxu0 %v109
  %326 = vmatprep.subr.mxu0 0.0
  %327 = vmatpush1.msra.mxu0 %v110
  %328 = vmatprep.subr.mxu0 0.0
  %329 = vmatpush1.msra.mxu0 %v111
  %330 = vmatprep.subr.mxu0 0.0
  %331 = vmatpush1.msra.mxu0 %v112
  %332 = vmatprep.subr.mxu0 0.0
  %333 = vmatpush1.msra.mxu0 %v113
  %334 = vmatprep.mubr.f32.mxu0 %v16
  %335 = vmatmul.mubr.f32.gmra.mrb[0].mxu0 %v15
  %v336 = vpop.f32.mrb[0].mxu0
  %v337 = vadd.f32 %v267, %v336
  %v338 = vpop.f32.mrb[0].mxu0
  %339 = vdwg.mxu0
  %340 = vmatprep.subr.mxu0 0.0
  %341 = vmatpush1.msra.mxu0 %v114
  %342 = vmatprep.subr.mxu0 0.0
  %343 = vmatpush1.msra.mxu0 %v115
  %344 = vmatprep.subr.mxu0 0.0
  %345 = vmatpush1.msra.mxu0 %v116
  %346 = vmatprep.subr.mxu0 0.0
  %347 = vmatpush1.msra.mxu0 %v117
  %348 = vmatprep.subr.mxu0 0.0
  %349 = vmatpush1.msra.mxu0 %v118
  %350 = vmatprep.subr.mxu0 0.0
  %351 = vmatpush1.msra.mxu0 %v119
  %352 = vmatprep.subr.mxu0 0.0
  %353 = vmatpush1.msra.mxu0 %v120
  %354 = vmatprep.subr.mxu0 0.0
  %355 = vmatpush1.msra.mxu0 %v121
  %356 = vmatprep.subr.mxu0 0.0
  %357 = vmatpush1.msra.mxu0 %v122
  %358 = vmatprep.subr.mxu0 0.0
  %359 = vmatpush1.msra.mxu0 %v123
  %360 = vmatprep.subr.mxu0 0.0
  %361 = vmatpush1.msra.mxu0 %v124
  %362 = vmatprep.subr.mxu0 0.0
  %363 = vmatpush1.msra.mxu0 %v125
  %364 = vmatprep.subr.mxu0 0.0
  %365 = vmatpush1.msra.mxu0 %v126
  %366 = vmatprep.subr.mxu0 0.0
  %367 = vmatpush1.msra.mxu0 %v127
  %368 = vmatprep.subr.mxu0 0.0
  %369 = vmatpush1.msra.mxu0 %v128
  %370 = vmatprep.subr.mxu0 0.0
  %371 = vmatpush1.msra.mxu0 %v129
  %372 = vmatprep.subr.mxu0 0.0
  %373 = vmatpush1.msra.mxu0 0.0
  %374 = vmatprep.subr.mxu0 0.0
  %375 = vmatpush1.msra.mxu0 0.0
  %376 = vmatprep.subr.mxu0 0.0
  %377 = vmatpush1.msra.mxu0 0.0
  %378 = vmatprep.subr.mxu0 0.0
  %379 = vmatpush1.msra.mxu0 0.0
  %380 = vmatprep.subr.mxu0 0.0
  %381 = vmatpush1.msra.mxu0 0.0
  %382 = vmatprep.subr.mxu0 0.0
  %383 = vmatpush1.msra.mxu0 0.0
  %384 = vmatprep.subr.mxu0 0.0
  %385 = vmatpush1.msra.mxu0 0.0
  %386 = vmatprep.subr.mxu0 0.0
  %387 = vmatpush1.msra.mxu0 0.0
  %388 = vmatprep.subr.mxu0 0.0
  %389 = vmatpush1.msra.mxu0 0.0
  %390 = vmatprep.subr.mxu0 0.0
  %391 = vmatpush1.msra.mxu0 0.0
  %392 = vmatprep.subr.mxu0 0.0
  %393 = vmatpush1.msra.mxu0 0.0
  %394 = vmatprep.subr.mxu0 0.0
  %395 = vmatpush1.msra.mxu0 0.0
  %396 = vmatprep.subr.mxu0 0.0
  %397 = vmatpush1.msra.mxu0 0.0
  %398 = vmatprep.subr.mxu0 0.0
  %399 = vmatpush1.msra.mxu0 0.0
  %400 = vmatprep.subr.mxu0 0.0
  %401 = vmatpush1.msra.mxu0 0.0
  %402 = vmatprep.subr.mxu0 0.0
  %403 = vmatpush1.msra.mxu0 0.0
  %404 = vmatprep.mubr.f32.mxu0 0.0
  %405 = vmatmul.mubr.f32.gmra.mrb[0].mxu0 %v17
  %v406 = vpop.f32.mrb[0].mxu0
  %v407 = vadd.f32 %v337, %v406
  %v408 = vpop.f32.mrb[0].mxu0
  %409 = vdwg.mxu0
  %v410 = vmax.f32 %v407, 0.0
  %411 = vst [vmem:[%s2] sm:$0xff] %v410
  // Predicated region
  $region10: #{forward.1} parent=0 // pred_check
    _
  $region11: #{forward.1} parent=0 // pred_check_branch
    %413 = sbr.rel (0) target = $region13
  $region12: #{forward.1} parent=0 // pred_region
    _
  $region13: #{forward.1} parent=0 // pred_fallthru
    _
  // Predicated region
  $region14: #{forward.1} parent=0 // pred_check
    _
  $region15: #{forward.1} parent=0 // pred_check_branch
    %415 = sbr.rel (0) target = $region17
  $region16: #{forward.1} parent=0 // pred_region
    _
  $region17: #{forward.1} parent=0 // pred_fallthru
    _

</llo_original>
